<compile_context>
chip_gen: v6e
topology: v6e:2x2x1
jax: 0.10.0
libtpu: 0.0.40
codegen_flags: <defaults>
</compile_context>

<pallas_src>
import jax
import jax.numpy as jnp
from jax.experimental import pallas as pl
from jax.experimental.pallas import tpu as pltpu

NUM_ACTIONS = 2          # implied by "arange(B) * 2 + actions" in the reference code
_LANES = 128             # each tile writes one full 128-lane row of partials


# ------------------------------- kernel ------------------------------------
def dqn_loss_kernel(obs_ref, new_obs_ref, rad_ref,
                    w1_ref, b1_ref, w2_ref, b2_ref,
                    tw1_ref, tb1_ref, tw2_ref, tb2_ref,
                    out_ref):
    """One batch tile: 2-layer MLP for current + target nets -> partial Huber sum.

    Per-tile shapes (static):
      obs_ref, new_obs_ref : [TB, D]   f32  (cast to bf16 in-kernel for the MXU)
      rad_ref              : [TB, 4]   f32  (reward, action, gamma*(1-done), valid)
      w1/tw1               : [D, H]    bf16 (VMEM-resident across the grid)
      b1/tb1               : [1, H]    f32
      w2/tw2               : [H, A]    bf16
      b2/tb2               : [1, A]    f32
      out_ref              : [1, 128]  f32  (partial Huber sum in lane 0)
    """
    # ---- current-policy network: Q(obs) -----------------------------------
    x = obs_ref[...].astype(jnp.bfloat16)
    h = jnp.maximum(
        jnp.dot(x, w1_ref[...], preferred_element_type=jnp.float32) + b1_ref[...],
        0.0)
    q_cur = (jnp.dot(h.astype(jnp.bfloat16), w2_ref[...],
                     preferred_element_type=jnp.float32) + b2_ref[...])       # [TB, A]

    # ---- target-policy network: Q(new_obs) (forward-only => detach) -------
    xn = new_obs_ref[...].astype(jnp.bfloat16)
    hn = jnp.maximum(
        jnp.dot(xn, tw1_ref[...], preferred_element_type=jnp.float32) + tb1_ref[...],
        0.0)
    q_next = (jnp.dot(hn.astype(jnp.bfloat16), tw2_ref[...],
                      preferred_element_type=jnp.float32) + tb2_ref[...])     # [TB, A]

    rew   = rad_ref[:, 0:1]        # [TB, 1]
    act   = rad_ref[:, 1:2]        # [TB, 1]  action in {0, 1} (exact in f32)
    gdone = rad_ref[:, 2:3]        # [TB, 1]  discount * (1 - done)
    valid = rad_ref[:, 3:4]        # [TB, 1]  0 for batch-padding rows

    # gather Q[i, actions[i]] via a 2-lane select (NUM_ACTIONS == 2)
    pred = jnp.where(act < 0.5, q_cur[:, 0:1], q_cur[:, 1:2])                 # [TB, 1]

    # Bellman target; max over A==2 as a direct VPU max (no XLU cross-lane reduce)
    max_q_next = jnp.maximum(q_next[:, 0:1], q_next[:, 1:2])                  # [TB, 1]
    target = gdone * max_q_next + rew

    # SmoothL1 (Huber, beta=1.0); padded rows masked out via `valid`
    diff = pred - target
    ad = jnp.abs(diff)
    huber = jnp.where(ad < 1.0, 0.5 * diff * diff, ad - 0.5) * valid

    # TODO(synk): if the elementwise tail ever binds at replay-scale B, switch the
    # rad stream / Huber math to a lane-major [1, TB] layout.
    partial = jnp.sum(huber)
    lane = jax.lax.broadcasted_iota(jnp.int32, (1, _LANES), 1)
    out_ref[...] = jnp.where(lane == 0, partial, 0.0)   # full-lane, unmasked store


# ------------------------------- wrapper ------------------------------------
def _round_up(x, m):
    return (x + m - 1) // m * m


def dqn_loss(obs, new_obs, rewards, actions, dones,
             cur_params, tgt_params, discount_factor, *, tile_b=1024):
    """Forward DQN SmoothL1 loss (mean reduction), mirroring dqn/dqn.py:Loss.forward."""
    B, D = obs.shape
    w1, b1, w2, b2 = cur_params
    tw1, tb1, tw2, tb2 = tgt_params
    H = w1.shape[1]
    A = w2.shape[1]
    assert A == NUM_ACTIONS == 2, "reference code hard-codes 2 actions (arange*2+a)"

    # Sublane-aligned batch tile (16 covers both f32 and bf16 packing).
    TB = min(_round_up(B, 16), _round_up(tile_b, 16))
    Bp = _round_up(B, TB)
    num_tiles = Bp // TB

    # Per-row scalar stream: (reward, action, gamma*(1-done), valid). Folding the
    # discount here keeps it a runtime value (no recompile per discount) and
    # drops a kernel multiply. Batch-padding rows get valid = 0.
    rad = jnp.stack([rewards.astype(jnp.float32),
                     actions.astype(jnp.float32),
                     discount_factor * (1.0 - dones.astype(jnp.float32)),
                     jnp.ones((B,), jnp.float32)], axis=1)                # [B, 4]

    obs_p = obs.astype(jnp.float32)
    new_obs_p = new_obs.astype(jnp.float32)
    if Bp != B:
        pad = ((0, Bp - B), (0, 0))
        obs_p = jnp.pad(obs_p, pad)
        new_obs_p = jnp.pad(new_obs_p, pad)
        rad = jnp.pad(rad, pad)

    # MXU operands in bf16 (f32 accumulation inside the kernel). In a training
    # loop, hoist these casts out of the per-step path (the target net changes
    # rarely); here they are tiny one-off ops.
    w1_b, w2_b = w1.astype(jnp.bfloat16), w2.astype(jnp.bfloat16)
    tw1_b, tw2_b = tw1.astype(jnp.bfloat16), tw2.astype(jnp.bfloat16)
    b1_f, b2_f = b1.astype(jnp.float32), b2.astype(jnp.float32)
    tb1_f, tb2_f = tb1.astype(jnp.float32), tb2.astype(jnp.float32)

    tiled = lambda i: (i, 0)       # batch-tiled inputs
    resident = lambda i: (0, 0)    # weights/biases: same block every step -> resident

    partials = pl.pallas_call(
        dqn_loss_kernel,
        out_shape=jax.ShapeDtypeStruct((1, _LANES * num_tiles), jnp.float32),
        grid=(num_tiles,),
        in_specs=[
            pl.BlockSpec((TB, D), tiled),          # obs
            pl.BlockSpec((TB, D), tiled),          # new_obs
            pl.BlockSpec((TB, 4), tiled),          # rad
            pl.BlockSpec((D, H), resident),        # w1
            pl.BlockSpec((1, H), resident),        # b1
            pl.BlockSpec((H, A), resident),        # w2
            pl.BlockSpec((1, A), resident),        # b2
            pl.BlockSpec((D, H), resident),        # tw1
            pl.BlockSpec((1, H), resident),        # tb1
            pl.BlockSpec((H, A), resident),        # tw2
            pl.BlockSpec((1, A), resident),        # tb2
        ],
        out_specs=pl.BlockSpec((1, _LANES), lambda i: (0, i)),
        compiler_params=pltpu.CompilerParams(
            dimension_semantics=("parallel",),     # v7x: shard tiles over both TCs
            # Budget: 2x-buffered (obs + new_obs + rad) tiles + resident weights
            # + [TB, H] f32 intermediates. 32 MiB is comfortable for TB up to a
            # few thousand at these widths and is safe on v7x's 64 MiB VMEM;
            # re-derive TB together with this limit per generation for larger H.
            vmem_limit_bytes=32 * 1024 * 1024),
    )(obs_p, new_obs_p, rad, w1_b, b1_f, w2_b, b2_f, tw1_b, tb1_f, tw2_b, tb2_f)

    # Finish the mean in the wrapper (padded rows contributed 0 via `valid`).
    return jnp.sum(partials) / B


# ---------------------------- references ------------------------------------
def _q_mixed(x, p):
    # Mirrors the kernel's MXU path: bf16 operands, f32 accumulation, f32 tail.
    w1, b1, w2, b2 = p
    h = jnp.maximum(
        jnp.dot(x.astype(jnp.bfloat16), w1.astype(jnp.bfloat16),
                preferred_element_type=jnp.float32) + b1, 0.0)
    return jnp.dot(h.astype(jnp.bfloat16), w2.astype(jnp.bfloat16),
                   preferred_element_type=jnp.float32) + b2


def _q_f32(x, p):
    # True f32 semantics (matches the PyTorch module).
    w1, b1, w2, b2 = p
    h = jnp.maximum(
        jnp.dot(x, w1, precision=jax.lax.Precision.HIGHEST) + b1, 0.0)
    return jnp.dot(h, w2, precision=jax.lax.Precision.HIGHEST) + b2


def _ref_loss(q_fn, obs, new_obs, rewards, actions, dones,
              cur_params, tgt_params, discount_factor):
    B = obs.shape[0]
    q_cur = q_fn(obs, cur_params)                                   # [B, A]
    flat_idx = jnp.arange(B) * NUM_ACTIONS + actions
    pred = jnp.take(q_cur.reshape(-1), flat_idx)                    # [B]
    max_q_next = jnp.max(q_fn(new_obs, tgt_params), axis=1)         # [B]
    target = discount_factor * max_q_next * (1.0 - dones) + rewards
    diff = pred - target
    ad = jnp.abs(diff)
    return jnp.mean(jnp.where(ad < 1.0, 0.5 * diff * diff, ad - 0.5))


def init_mlp(key, d_in, hidden, d_out):
    k1, k2, k3, k4 = jax.random.split(key, 4)
    w1 = jax.random.normal(k1, (d_in, hidden), jnp.float32) * 0.1
    b1 = jax.random.normal(k2, (1, hidden), jnp.float32) * 0.1
    w2 = jax.random.normal(k3, (hidden, d_out), jnp.float32) * 0.1
    b2 = jax.random.normal(k4, (1, d_out), jnp.float32) * 0.1
    return (w1, b1, w2, b2)


if __name__ == "__main__":
    B, OBS_DIM, HIDDEN = 100, 4, 32        # B=100 with tile_b=64 -> 2 tiles + padding path
    DISCOUNT = 0.99

    key = jax.random.PRNGKey(0)
    k_obs, k_new, k_rew, k_act, k_done, k_cur, k_tgt = jax.random.split(key, 7)

    obs = jax.random.normal(k_obs, (B, OBS_DIM), jnp.float32)
    new_obs = jax.random.normal(k_new, (B, OBS_DIM), jnp.float32)
    rewards = jax.random.normal(k_rew, (B,), jnp.float32)
    actions = jax.random.randint(k_act, (B,), 0, NUM_ACTIONS, jnp.int32)
    dones = jax.random.bernoulli(k_done, 0.3, (B,)).astype(jnp.float32)

    cur_params = init_mlp(k_cur, OBS_DIM, HIDDEN, NUM_ACTIONS)   # current policy
    tgt_params = init_mlp(k_tgt, OBS_DIM, HIDDEN, NUM_ACTIONS)   # target policy

    loss = dqn_loss(obs, new_obs, rewards, actions, dones,
                    cur_params, tgt_params, DISCOUNT, tile_b=64)
    jax.block_until_ready(loss)

    ref_mixed = _ref_loss(_q_mixed, obs, new_obs, rewards, actions, dones,
                          cur_params, tgt_params, DISCOUNT)
    ref_f32 = _ref_loss(_q_f32, obs, new_obs, rewards, actions, dones,
                        cur_params, tgt_params, DISCOUNT)

    # Tight check vs. the bf16-mirroring reference (validates the kernel itself),
    # loose check vs. the true f32 PyTorch-semantics reference.
    assert jnp.allclose(loss, ref_mixed, atol=1e-5, rtol=1e-4), (loss, ref_mixed)
    assert jnp.allclose(loss, ref_f32, atol=3e-2, rtol=3e-2), (loss, ref_f32)

    print("KERNEL_OK")
</pallas_src>

<mosaic_0001>
module attributes {stable_mosaic.version = 11 : i64} {
  func.func @dqn_loss_kernel(%arg0: i32, %arg1: memref<64x4xf32, #tpu.memory_space<vmem>>, %arg2: memref<64x4xf32, #tpu.memory_space<vmem>>, %arg3: memref<64x4xf32, #tpu.memory_space<vmem>>, %arg4: memref<4x32xbf16, #tpu.memory_space<vmem>>, %arg5: memref<1x32xf32, #tpu.memory_space<vmem>>, %arg6: memref<32x2xbf16, #tpu.memory_space<vmem>>, %arg7: memref<1x2xf32, #tpu.memory_space<vmem>>, %arg8: memref<4x32xbf16, #tpu.memory_space<vmem>>, %arg9: memref<1x32xf32, #tpu.memory_space<vmem>>, %arg10: memref<32x2xbf16, #tpu.memory_space<vmem>>, %arg11: memref<1x2xf32, #tpu.memory_space<vmem>>, %arg12: memref<1x128xf32, #tpu.memory_space<vmem>>) attributes {dimension_semantics = [#tpu.dimension_semantics<parallel>], iteration_bounds = array<i64: 2>, scalar_prefetch = 0 : i64, scratch_operands = 0 : i64, tpu.core_type = #tpu.core_type<tc>, window_params = [{transform_indices = @transform_0, window_bounds = array<i64: 64, 4>}, {transform_indices = @transform_1, window_bounds = array<i64: 64, 4>}, {transform_indices = @transform_2, window_bounds = array<i64: 64, 4>}, {pipeline_mode = #tpu.pipeline_mode<synchronous>, transform_indices = @transform_3, window_bounds = array<i64: 4, 32>}, {pipeline_mode = #tpu.pipeline_mode<synchronous>, transform_indices = @transform_4, window_bounds = array<i64: 1, 32>}, {pipeline_mode = #tpu.pipeline_mode<synchronous>, transform_indices = @transform_5, window_bounds = array<i64: 32, 2>}, {pipeline_mode = #tpu.pipeline_mode<synchronous>, transform_indices = @transform_6, window_bounds = array<i64: 1, 2>}, {pipeline_mode = #tpu.pipeline_mode<synchronous>, transform_indices = @transform_7, window_bounds = array<i64: 4, 32>}, {pipeline_mode = #tpu.pipeline_mode<synchronous>, transform_indices = @transform_8, window_bounds = array<i64: 1, 32>}, {pipeline_mode = #tpu.pipeline_mode<synchronous>, transform_indices = @transform_9, window_bounds = array<i64: 32, 2>}, {pipeline_mode = #tpu.pipeline_mode<synchronous>, transform_indices = @transform_10, window_bounds = array<i64: 1, 2>}, {transform_indices = @transform_11, window_bounds = array<i64: 1, 128>}]} {
    %c0 = arith.constant 0 : index
    %c0_0 = arith.constant 0 : index
    %0 = vector.load %arg1[%c0, %c0_0] : memref<64x4xf32, #tpu.memory_space<vmem>>, vector<64x4xf32>
    %1 = arith.truncf %0 : vector<64x4xf32> to vector<64x4xbf16>
    %c0_1 = arith.constant 0 : index
    %c0_2 = arith.constant 0 : index
    %2 = vector.load %arg4[%c0_1, %c0_2] : memref<4x32xbf16, #tpu.memory_space<vmem>>, vector<4x32xbf16>
    %cst = arith.constant dense<0.000000e+00> : vector<64x32xf32>
    %3 = tpu.matmul %1, %2, %cst {dimension_numbers = #tpu.dot_dimension_numbers<[1], [0], [0], [1], [0, 0, 1, 1], [], []>} : vector<64x4xbf16>, vector<4x32xbf16>, vector<64x32xf32> -> vector<64x32xf32>
    %c0_3 = arith.constant 0 : index
    %c0_4 = arith.constant 0 : index
    %4 = vector.load %arg5[%c0_3, %c0_4] : memref<1x32xf32, #tpu.memory_space<vmem>>, vector<1x32xf32>
    %5 = vector.broadcast %4 : vector<1x32xf32> to vector<64x32xf32>
    %6 = arith.addf %3, %5 : vector<64x32xf32>
    %cst_5 = arith.constant 0.000000e+00 : f32
    %7 = vector.broadcast %cst_5 : f32 to vector<64x32xf32>
    %8 = arith.maximumf %6, %7 : vector<64x32xf32>
    %9 = arith.truncf %8 : vector<64x32xf32> to vector<64x32xbf16>
    %c0_6 = arith.constant 0 : index
    %c0_7 = arith.constant 0 : index
    %10 = vector.load %arg6[%c0_6, %c0_7] : memref<32x2xbf16, #tpu.memory_space<vmem>>, vector<32x2xbf16>
    %cst_8 = arith.constant dense<0.000000e+00> : vector<64x2xf32>
    %11 = tpu.matmul %9, %10, %cst_8 {dimension_numbers = #tpu.dot_dimension_numbers<[1], [0], [0], [1], [0, 0, 1, 1], [], []>} : vector<64x32xbf16>, vector<32x2xbf16>, vector<64x2xf32> -> vector<64x2xf32>
    %c0_9 = arith.constant 0 : index
    %c0_10 = arith.constant 0 : index
    %12 = vector.load %arg7[%c0_9, %c0_10] : memref<1x2xf32, #tpu.memory_space<vmem>>, vector<1x2xf32>
    %13 = vector.broadcast %12 : vector<1x2xf32> to vector<64x2xf32>
    %14 = arith.addf %11, %13 : vector<64x2xf32>
    %c0_11 = arith.constant 0 : index
    %c0_12 = arith.constant 0 : index
    %15 = vector.load %arg2[%c0_11, %c0_12] : memref<64x4xf32, #tpu.memory_space<vmem>>, vector<64x4xf32>
    %16 = arith.truncf %15 : vector<64x4xf32> to vector<64x4xbf16>
    %c0_13 = arith.constant 0 : index
    %c0_14 = arith.constant 0 : index
    %17 = vector.load %arg8[%c0_13, %c0_14] : memref<4x32xbf16, #tpu.memory_space<vmem>>, vector<4x32xbf16>
    %cst_15 = arith.constant dense<0.000000e+00> : vector<64x32xf32>
    %18 = tpu.matmul %16, %17, %cst_15 {dimension_numbers = #tpu.dot_dimension_numbers<[1], [0], [0], [1], [0, 0, 1, 1], [], []>} : vector<64x4xbf16>, vector<4x32xbf16>, vector<64x32xf32> -> vector<64x32xf32>
    %c0_16 = arith.constant 0 : index
    %c0_17 = arith.constant 0 : index
    %19 = vector.load %arg9[%c0_16, %c0_17] : memref<1x32xf32, #tpu.memory_space<vmem>>, vector<1x32xf32>
    %20 = vector.broadcast %19 : vector<1x32xf32> to vector<64x32xf32>
    %21 = arith.addf %18, %20 : vector<64x32xf32>
    %cst_18 = arith.constant 0.000000e+00 : f32
    %22 = vector.broadcast %cst_18 : f32 to vector<64x32xf32>
    %23 = arith.maximumf %21, %22 : vector<64x32xf32>
    %24 = arith.truncf %23 : vector<64x32xf32> to vector<64x32xbf16>
    %c0_19 = arith.constant 0 : index
    %c0_20 = arith.constant 0 : index
    %25 = vector.load %arg10[%c0_19, %c0_20] : memref<32x2xbf16, #tpu.memory_space<vmem>>, vector<32x2xbf16>
    %cst_21 = arith.constant dense<0.000000e+00> : vector<64x2xf32>
    %26 = tpu.matmul %24, %25, %cst_21 {dimension_numbers = #tpu.dot_dimension_numbers<[1], [0], [0], [1], [0, 0, 1, 1], [], []>} : vector<64x32xbf16>, vector<32x2xbf16>, vector<64x2xf32> -> vector<64x2xf32>
    %c0_22 = arith.constant 0 : index
    %c0_23 = arith.constant 0 : index
    %27 = vector.load %arg11[%c0_22, %c0_23] : memref<1x2xf32, #tpu.memory_space<vmem>>, vector<1x2xf32>
    %28 = vector.broadcast %27 : vector<1x2xf32> to vector<64x2xf32>
    %29 = arith.addf %26, %28 : vector<64x2xf32>
    %c0_24 = arith.constant 0 : index
    %c0_25 = arith.constant 0 : index
    %30 = vector.load %arg3[%c0_24, %c0_25] : memref<64x4xf32, #tpu.memory_space<vmem>>, vector<64x1xf32>
    %c0_26 = arith.constant 0 : index
    %c1 = arith.constant 1 : index
    %31 = vector.load %arg3[%c0_26, %c1] : memref<64x4xf32, #tpu.memory_space<vmem>>, vector<64x1xf32>
    %c0_27 = arith.constant 0 : index
    %c2 = arith.constant 2 : index
    %32 = vector.load %arg3[%c0_27, %c2] : memref<64x4xf32, #tpu.memory_space<vmem>>, vector<64x1xf32>
    %c0_28 = arith.constant 0 : index
    %c3 = arith.constant 3 : index
    %33 = vector.load %arg3[%c0_28, %c3] : memref<64x4xf32, #tpu.memory_space<vmem>>, vector<64x1xf32>
    %cst_29 = arith.constant 5.000000e-01 : f32
    %34 = vector.broadcast %cst_29 : f32 to vector<64x1xf32>
    %35 = arith.cmpf olt, %31, %34 : vector<64x1xf32>
    %36 = vector.extract_strided_slice %14 {offsets = [0, 0], sizes = [64, 1], strides = [1, 1]} : vector<64x2xf32> to vector<64x1xf32>
    %37 = vector.extract_strided_slice %14 {offsets = [0, 1], sizes = [64, 1], strides = [1, 1]} : vector<64x2xf32> to vector<64x1xf32>
    %38 = arith.select %35, %36, %37 : vector<64x1xi1>, vector<64x1xf32>
    %39 = vector.extract_strided_slice %29 {offsets = [0, 0], sizes = [64, 1], strides = [1, 1]} : vector<64x2xf32> to vector<64x1xf32>
    %40 = vector.extract_strided_slice %29 {offsets = [0, 1], sizes = [64, 1], strides = [1, 1]} : vector<64x2xf32> to vector<64x1xf32>
    %41 = arith.maximumf %39, %40 : vector<64x1xf32>
    %42 = arith.mulf %32, %41 : vector<64x1xf32>
    %43 = arith.addf %42, %30 : vector<64x1xf32>
    %44 = arith.subf %38, %43 : vector<64x1xf32>
    %45 = math.absf %44 : vector<64x1xf32>
    %cst_30 = arith.constant 1.000000e+00 : f32
    %46 = vector.broadcast %cst_30 : f32 to vector<64x1xf32>
    %47 = arith.cmpf olt, %45, %46 : vector<64x1xf32>
    %cst_31 = arith.constant 5.000000e-01 : f32
    %48 = vector.broadcast %cst_31 : f32 to vector<64x1xf32>
    %49 = arith.mulf %48, %44 : vector<64x1xf32>
    %50 = arith.mulf %49, %44 : vector<64x1xf32>
    %cst_32 = arith.constant 5.000000e-01 : f32
    %51 = vector.broadcast %cst_32 : f32 to vector<64x1xf32>
    %52 = arith.subf %45, %51 : vector<64x1xf32>
    %53 = arith.select %47, %50, %52 : vector<64x1xi1>, vector<64x1xf32>
    %54 = arith.mulf %53, %33 : vector<64x1xf32>
    %55 = vector.shape_cast %54 : vector<64x1xf32> to vector<1x64x1xf32>
    %cst_33 = arith.constant dense<0.000000e+00> : vector<1xf32>
    %56 = vector.multi_reduction <add>, %55, %cst_33 [1, 2] : vector<1x64x1xf32> to vector<1xf32>
    %57 = vector.shape_cast %56 : vector<1xf32> to vector<1x1x1xf32>
    %58 = vector.extract %57[0, 0, 0] : f32 from vector<1x1x1xf32>
    %59 = tpu.iota {dimensions = array<i32: 1>} : vector<1x128xi32>
    %c0_i32 = arith.constant 0 : i32
    %60 = vector.broadcast %c0_i32 : i32 to vector<1x128xi32>
    %61 = arith.cmpi eq, %59, %60 : vector<1x128xi32>
    %cst_34 = arith.constant 0.000000e+00 : f32
    %62 = vector.broadcast %58 : f32 to vector<1x128xf32>
    %63 = vector.broadcast %cst_34 : f32 to vector<1x128xf32>
    %64 = arith.select %61, %62, %63 : vector<1x128xi1>, vector<1x128xf32>
    %c0_35 = arith.constant 0 : index
    %c0_36 = arith.constant 0 : index
    %65 = vector.load %arg12[%c0_35, %c0_36] : memref<1x128xf32, #tpu.memory_space<vmem>>, vector<1x128xf32>
    tpu.vector_store %arg12[%c0_35, %c0_36], %64 {strides = array<i32>} : memref<1x128xf32, #tpu.memory_space<vmem>>, vector<1x128xf32>,
    return
  }
  func.func @transform_0(%arg0: i32) -> (i32, i32) {
    %c0_i32 = arith.constant 0 : i32
    %c0_i32_0 = arith.constant 0 : i32
    return %arg0, %c0_i32 : i32, i32
  }
  func.func @transform_1(%arg0: i32) -> (i32, i32) {
    %c0_i32 = arith.constant 0 : i32
    %c0_i32_0 = arith.constant 0 : i32
    return %arg0, %c0_i32 : i32, i32
  }
  func.func @transform_2(%arg0: i32) -> (i32, i32) {
    %c0_i32 = arith.constant 0 : i32
    %c0_i32_0 = arith.constant 0 : i32
    return %arg0, %c0_i32 : i32, i32
  }
  func.func @transform_3(%arg0: i32) -> (i32, i32) {
    %c0_i32 = arith.constant 0 : i32
    %c0_i32_0 = arith.constant 0 : i32
    %c0_i32_1 = arith.constant 0 : i32
    return %c0_i32, %c0_i32_0 : i32, i32
  }
  func.func @transform_4(%arg0: i32) -> (i32, i32) {
    %c0_i32 = arith.constant 0 : i32
    %c0_i32_0 = arith.constant 0 : i32
    %c0_i32_1 = arith.constant 0 : i32
    return %c0_i32, %c0_i32_0 : i32, i32
  }
  func.func @transform_5(%arg0: i32) -> (i32, i32) {
    %c0_i32 = arith.constant 0 : i32
    %c0_i32_0 = arith.constant 0 : i32
    %c0_i32_1 = arith.constant 0 : i32
    return %c0_i32, %c0_i32_0 : i32, i32
  }
  func.func @transform_6(%arg0: i32) -> (i32, i32) {
    %c0_i32 = arith.constant 0 : i32
    %c0_i32_0 = arith.constant 0 : i32
    %c0_i32_1 = arith.constant 0 : i32
    return %c0_i32, %c0_i32_0 : i32, i32
  }
  func.func @transform_7(%arg0: i32) -> (i32, i32) {
    %c0_i32 = arith.constant 0 : i32
    %c0_i32_0 = arith.constant 0 : i32
    %c0_i32_1 = arith.constant 0 : i32
    return %c0_i32, %c0_i32_0 : i32, i32
  }
  func.func @transform_8(%arg0: i32) -> (i32, i32) {
    %c0_i32 = arith.constant 0 : i32
    %c0_i32_0 = arith.constant 0 : i32
    %c0_i32_1 = arith.constant 0 : i32
    return %c0_i32, %c0_i32_0 : i32, i32
  }
  func.func @transform_9(%arg0: i32) -> (i32, i32) {
    %c0_i32 = arith.constant 0 : i32
    %c0_i32_0 = arith.constant 0 : i32
    %c0_i32_1 = arith.constant 0 : i32
    return %c0_i32, %c0_i32_0 : i32, i32
  }
  func.func @transform_10(%arg0: i32) -> (i32, i32) {
    %c0_i32 = arith.constant 0 : i32
    %c0_i32_0 = arith.constant 0 : i32
    %c0_i32_1 = arith.constant 0 : i32
    return %c0_i32, %c0_i32_0 : i32, i32
  }
  func.func @transform_11(%arg0: i32) -> (i32, i32) {
    %c0_i32 = arith.constant 0 : i32
    %c0_i32_0 = arith.constant 0 : i32
    return %c0_i32, %arg0 : i32, i32
  }
}

</mosaic_0001>

<llo_original>
// kernel: tpu_custom_call.1
$region0: #{tpu_custom_call.1}
  #allocation0 [shape = 'u32[]', space=smem, size = 0x4, offset = 0x4, fixed_abs, tag = 'smem constant byte address 0x4 - core index']
  #allocation1 [shape = 'u32[144,128]{1,0:T(1,128)}', space=vmem, size = 0x12000, scoped, tag = 'internal scratch']
  %s0 = inlined_call_operand.vmem [shape: f32[128,4], index: 0, kind: input, shape index: {}]
  %s1 = inlined_call_operand.vmem [shape: f32[128,4], index: 1, kind: input, shape index: {}]
  %s2 = inlined_call_operand.vmem [shape: f32[128,4], index: 2, kind: input, shape index: {}]
  %s3 = inlined_call_operand.vmem [shape: bf16[4,32], index: 3, kind: input, shape index: {}]
  %s4 = inlined_call_operand.vmem [shape: f32[1,32], index: 4, kind: input, shape index: {}]
  %s5 = inlined_call_operand.vmem [shape: bf16[32,2], index: 5, kind: input, shape index: {}]
  %s6 = inlined_call_operand.vmem [shape: f32[1,2], index: 6, kind: input, shape index: {}]
  %s7 = inlined_call_operand.vmem [shape: bf16[4,32], index: 7, kind: input, shape index: {}]
  %s8 = inlined_call_operand.vmem [shape: f32[1,32], index: 8, kind: input, shape index: {}]
  %s9 = inlined_call_operand.vmem [shape: bf16[32,2], index: 9, kind: input, shape index: {}]
  %s10 = inlined_call_operand.vmem [shape: f32[1,2], index: 10, kind: input, shape index: {}]
  %s11 = inlined_call_operand.hbm [shape: f32[1,256], index: 11, kind: output, shape index: {}]
  %s12 = sld [smem:[#allocation0]]
  $region77: #{tpu_custom_call.1} parent=0
    _
  %s14 = ssub.s32 1, %s12
  %s15 = scalar_select 0, %s14, %s12
  $region1: #{tpu_custom_call.1} parent=0
    #allocation2 [shape = 'u8[1024]{0}', space=vmem, size = 0x400, scoped, tag = 'output window, operand 0']
    #allocation3 [shape = 's32[2]{0}', space=sflag, size = 0x8, scoped, tag = 'scoped memory for tpu_custom_call.1']
    %16 = vsyncpa [#allocation3], 0
    %s17 = scalar_lea.sflag [#allocation3], 1
    %18 = vsyncpa %s17, 0
    loop: start=0, step=1, limit=4
    $region2: #{tpu_custom_call.1} parent=1 // loop_pre_header
      _
    $region3: #{tpu_custom_call.1} parent=1 // loop_header
      %s20 = sphi 0, %s24
      %p21 = scmp.ge.s32.totalorder %s20, 4
      %s30 = sphi 0, %s32
      %s33 = sphi 0, %s30
      %s34 = sphi 0, %s33
      %s50 = sphi 0, %s34
      %s56 = sphi 0, %s58
      %s59 = sphi 0, %s56
      %s60 = sphi 0, %s59
      %s76 = sphi 0, %s60
      %s82 = sphi 0, %s84
      %s85 = sphi 0, %s82
      %s86 = sphi 0, %s85
      %s102 = sphi 0, %s86
      %s106 = sphi 0, %s106
      %s108 = sphi 0, %s106
      %s109 = sphi 0, %s108
      %s123 = sphi 0, %s109
      %s127 = sphi 0, %s127
      %s129 = sphi 0, %s127
      %s130 = sphi 0, %s129
      %s144 = sphi 0, %s130
      %s148 = sphi 0, %s148
      %s150 = sphi 0, %s148
      %s151 = sphi 0, %s150
      %s165 = sphi 0, %s151
      %s169 = sphi 0, %s169
      %s171 = sphi 0, %s169
      %s172 = sphi 0, %s171
      %s186 = sphi 0, %s172
      %s190 = sphi 0, %s190
      %s192 = sphi 0, %s190
      %s193 = sphi 0, %s192
      %s207 = sphi 0, %s193
      %s211 = sphi 0, %s211
      %s213 = sphi 0, %s211
      %s214 = sphi 0, %s213
      %s228 = sphi 0, %s214
      %s232 = sphi 0, %s232
      %s234 = sphi 0, %s232
      %s235 = sphi 0, %s234
      %s249 = sphi 0, %s235
      %s253 = sphi 0, %s253
      %s255 = sphi 0, %s253
      %s256 = sphi 0, %s255
      %s270 = sphi 0, %s256
      %s276 = sphi 0, %s278
      %s279 = sphi 0, %s276
      %s280 = sphi 0, %s279
      %s296 = sphi 0, %s280
    $region4: #{tpu_custom_call.1} parent=1 // loop_header_branch
      %23 = sbr.rel (%p21) target = $region8
    $region5: #{tpu_custom_call.1} parent=1 // loop_body
      %s25 = ssub.s32 %s20, 1
      %s26 = ssub.s32 %s20, 2
      %s27 = sadd.s32 %s20, 1
      %s28 = ssub.s32 %s20, %s27
      %p29 = scmp.eq.s32.totalorder %s28, 0
      %s31 = sadd.s32 %s30, 1
      %s32 = scalar_select %p29, %s30, %s31
      %p35 = pneg %p29
      %p36 = scmp.eq.s32.totalorder %s20, 1
      %p37 = por %p35, %p36
      %p38 = scmp.ne.s32.totalorder %s30, %s33
      %p39 = scmp.eq.s32.totalorder %s20, 0
      %p40 = por %p38, %p39
      %p41 = scmp.ne.s32.totalorder %s30, %s33
      %p42 = scmp.eq.s32.totalorder %s25, 1
      %p43 = por %p41, %p42
      %p44 = scmp.ne.s32.totalorder %s33, %s34
      %p45 = scmp.eq.s32.totalorder %s25, 0
      %p46 = por %p44, %p45
      %p47 = scmp.ne.s32.totalorder %s33, %s34
      %p48 = scmp.eq.s32.totalorder %s26, 1
      %p49 = por %p47, %p48
      %p51 = scmp.ne.s32.totalorder %s34, %s50
      %p52 = scmp.eq.s32.totalorder %s26, 0
      %p53 = por %p51, %p52
      %s54 = ssub.s32 %s20, %s27
      %p55 = scmp.eq.s32.totalorder %s54, 0
      %s57 = sadd.s32 %s56, 1
      %s58 = scalar_select %p55, %s56, %s57
      %p61 = pneg %p55
      %p62 = scmp.eq.s32.totalorder %s20, 1
      %p63 = por %p61, %p62
      %p64 = scmp.ne.s32.totalorder %s56, %s59
      %p65 = scmp.eq.s32.totalorder %s20, 0
      %p66 = por %p64, %p65
      %p67 = scmp.ne.s32.totalorder %s56, %s59
      %p68 = scmp.eq.s32.totalorder %s25, 1
      %p69 = por %p67, %p68
      %p70 = scmp.ne.s32.totalorder %s59, %s60
      %p71 = scmp.eq.s32.totalorder %s25, 0
      %p72 = por %p70, %p71
      %p73 = scmp.ne.s32.totalorder %s59, %s60
      %p74 = scmp.eq.s32.totalorder %s26, 1
      %p75 = por %p73, %p74
      %p77 = scmp.ne.s32.totalorder %s60, %s76
      %p78 = scmp.eq.s32.totalorder %s26, 0
      %p79 = por %p77, %p78
      %s80 = ssub.s32 %s20, %s27
      %p81 = scmp.eq.s32.totalorder %s80, 0
      %s83 = sadd.s32 %s82, 1
      %s84 = scalar_select %p81, %s82, %s83
      %p87 = pneg %p81
      %p88 = scmp.eq.s32.totalorder %s20, 1
      %p89 = por %p87, %p88
      %p90 = scmp.ne.s32.totalorder %s82, %s85
      %p91 = scmp.eq.s32.totalorder %s20, 0
      %p92 = por %p90, %p91
      %p93 = scmp.ne.s32.totalorder %s82, %s85
      %p94 = scmp.eq.s32.totalorder %s25, 1
      %p95 = por %p93, %p94
      %p96 = scmp.ne.s32.totalorder %s85, %s86
      %p97 = scmp.eq.s32.totalorder %s25, 0
      %p98 = por %p96, %p97
      %p99 = scmp.ne.s32.totalorder %s85, %s86
      %p100 = scmp.eq.s32.totalorder %s26, 1
      %p101 = por %p99, %p100
      %p103 = scmp.ne.s32.totalorder %s86, %s102
      %p104 = scmp.eq.s32.totalorder %s26, 0
      %p105 = por %p103, %p104
      %s107 = sadd.s32 %s106, 1
      %p110 = scmp.eq.s32.totalorder %s20, 1
      %p111 = scmp.ne.s32.totalorder %s106, %s108
      %p112 = scmp.eq.s32.totalorder %s20, 0
      %p113 = por %p111, %p112
      %p114 = scmp.ne.s32.totalorder %s106, %s108
      %p115 = scmp.eq.s32.totalorder %s25, 1
      %p116 = por %p114, %p115
      %p117 = scmp.ne.s32.totalorder %s108, %s109
      %p118 = scmp.eq.s32.totalorder %s25, 0
      %p119 = por %p117, %p118
      %p120 = scmp.ne.s32.totalorder %s108, %s109
      %p121 = scmp.eq.s32.totalorder %s26, 1
      %p122 = por %p120, %p121
      %p124 = scmp.ne.s32.totalorder %s109, %s123
      %p125 = scmp.eq.s32.totalorder %s26, 0
      %p126 = por %p124, %p125
      %s128 = sadd.s32 %s127, 1
      %p131 = scmp.eq.s32.totalorder %s20, 1
      %p132 = scmp.ne.s32.totalorder %s127, %s129
      %p133 = scmp.eq.s32.totalorder %s20, 0
      %p134 = por %p132, %p133
      %p135 = scmp.ne.s32.totalorder %s127, %s129
      %p136 = scmp.eq.s32.totalorder %s25, 1
      %p137 = por %p135, %p136
      %p138 = scmp.ne.s32.totalorder %s129, %s130
      %p139 = scmp.eq.s32.totalorder %s25, 0
      %p140 = por %p138, %p139
      %p141 = scmp.ne.s32.totalorder %s129, %s130
      %p142 = scmp.eq.s32.totalorder %s26, 1
      %p143 = por %p141, %p142
      %p145 = scmp.ne.s32.totalorder %s130, %s144
      %p146 = scmp.eq.s32.totalorder %s26, 0
      %p147 = por %p145, %p146
      %s149 = sadd.s32 %s148, 1
      %p152 = scmp.eq.s32.totalorder %s20, 1
      %p153 = scmp.ne.s32.totalorder %s148, %s150
      %p154 = scmp.eq.s32.totalorder %s20, 0
      %p155 = por %p153, %p154
      %p156 = scmp.ne.s32.totalorder %s148, %s150
      %p157 = scmp.eq.s32.totalorder %s25, 1
      %p158 = por %p156, %p157
      %p159 = scmp.ne.s32.totalorder %s150, %s151
      %p160 = scmp.eq.s32.totalorder %s25, 0
      %p161 = por %p159, %p160
      %p162 = scmp.ne.s32.totalorder %s150, %s151
      %p163 = scmp.eq.s32.totalorder %s26, 1
      %p164 = por %p162, %p163
      %p166 = scmp.ne.s32.totalorder %s151, %s165
      %p167 = scmp.eq.s32.totalorder %s26, 0
      %p168 = por %p166, %p167
      %s170 = sadd.s32 %s169, 1
      %p173 = scmp.eq.s32.totalorder %s20, 1
      %p174 = scmp.ne.s32.totalorder %s169, %s171
      %p175 = scmp.eq.s32.totalorder %s20, 0
      %p176 = por %p174, %p175
      %p177 = scmp.ne.s32.totalorder %s169, %s171
      %p178 = scmp.eq.s32.totalorder %s25, 1
      %p179 = por %p177, %p178
      %p180 = scmp.ne.s32.totalorder %s171, %s172
      %p181 = scmp.eq.s32.totalorder %s25, 0
      %p182 = por %p180, %p181
      %p183 = scmp.ne.s32.totalorder %s171, %s172
      %p184 = scmp.eq.s32.totalorder %s26, 1
      %p185 = por %p183, %p184
      %p187 = scmp.ne.s32.totalorder %s172, %s186
      %p188 = scmp.eq.s32.totalorder %s26, 0
      %p189 = por %p187, %p188
      %s191 = sadd.s32 %s190, 1
      %p194 = scmp.eq.s32.totalorder %s20, 1
      %p195 = scmp.ne.s32.totalorder %s190, %s192
      %p196 = scmp.eq.s32.totalorder %s20, 0
      %p197 = por %p195, %p196
      %p198 = scmp.ne.s32.totalorder %s190, %s192
      %p199 = scmp.eq.s32.totalorder %s25, 1
      %p200 = por %p198, %p199
      %p201 = scmp.ne.s32.totalorder %s192, %s193
      %p202 = scmp.eq.s32.totalorder %s25, 0
      %p203 = por %p201, %p202
      %p204 = scmp.ne.s32.totalorder %s192, %s193
      %p205 = scmp.eq.s32.totalorder %s26, 1
      %p206 = por %p204, %p205
      %p208 = scmp.ne.s32.totalorder %s193, %s207
      %p209 = scmp.eq.s32.totalorder %s26, 0
      %p210 = por %p208, %p209
      %s212 = sadd.s32 %s211, 1
      %p215 = scmp.eq.s32.totalorder %s20, 1
      %p216 = scmp.ne.s32.totalorder %s211, %s213
      %p217 = scmp.eq.s32.totalorder %s20, 0
      %p218 = por %p216, %p217
      %p219 = scmp.ne.s32.totalorder %s211, %s213
      %p220 = scmp.eq.s32.totalorder %s25, 1
      %p221 = por %p219, %p220
      %p222 = scmp.ne.s32.totalorder %s213, %s214
      %p223 = scmp.eq.s32.totalorder %s25, 0
      %p224 = por %p222, %p223
      %p225 = scmp.ne.s32.totalorder %s213, %s214
      %p226 = scmp.eq.s32.totalorder %s26, 1
      %p227 = por %p225, %p226
      %p229 = scmp.ne.s32.totalorder %s214, %s228
      %p230 = scmp.eq.s32.totalorder %s26, 0
      %p231 = por %p229, %p230
      %s233 = sadd.s32 %s232, 1
      %p236 = scmp.eq.s32.totalorder %s20, 1
      %p237 = scmp.ne.s32.totalorder %s232, %s234
      %p238 = scmp.eq.s32.totalorder %s20, 0
      %p239 = por %p237, %p238
      %p240 = scmp.ne.s32.totalorder %s232, %s234
      %p241 = scmp.eq.s32.totalorder %s25, 1
      %p242 = por %p240, %p241
      %p243 = scmp.ne.s32.totalorder %s234, %s235
      %p244 = scmp.eq.s32.totalorder %s25, 0
      %p245 = por %p243, %p244
      %p246 = scmp.ne.s32.totalorder %s234, %s235
      %p247 = scmp.eq.s32.totalorder %s26, 1
      %p248 = por %p246, %p247
      %p250 = scmp.ne.s32.totalorder %s235, %s249
      %p251 = scmp.eq.s32.totalorder %s26, 0
      %p252 = por %p250, %p251
      %s254 = sadd.s32 %s253, 1
      %p257 = scmp.eq.s32.totalorder %s20, 1
      %p258 = scmp.ne.s32.totalorder %s253, %s255
      %p259 = scmp.eq.s32.totalorder %s20, 0
      %p260 = por %p258, %p259
      %p261 = scmp.ne.s32.totalorder %s253, %s255
      %p262 = scmp.eq.s32.totalorder %s25, 1
      %p263 = por %p261, %p262
      %p264 = scmp.ne.s32.totalorder %s255, %s256
      %p265 = scmp.eq.s32.totalorder %s25, 0
      %p266 = por %p264, %p265
      %p267 = scmp.ne.s32.totalorder %s255, %s256
      %p268 = scmp.eq.s32.totalorder %s26, 1
      %p269 = por %p267, %p268
      %p271 = scmp.ne.s32.totalorder %s256, %s270
      %p272 = scmp.eq.s32.totalorder %s26, 0
      %p273 = por %p271, %p272
      %s274 = ssub.s32 %s20, %s27
      %p275 = scmp.eq.s32.totalorder %s274, 0
      %s277 = sadd.s32 %s276, 1
      %s278 = scalar_select %p275, %s276, %s277
      %p281 = pneg %p275
      %p282 = scmp.eq.s32.totalorder %s20, 1
      %p283 = por %p281, %p282
      %p284 = scmp.ne.s32.totalorder %s276, %s279
      %p285 = scmp.eq.s32.totalorder %s20, 0
      %p286 = por %p284, %p285
      %p287 = scmp.ne.s32.totalorder %s276, %s279
      %p288 = scmp.eq.s32.totalorder %s25, 1
      %p289 = por %p287, %p288
      %p290 = scmp.ne.s32.totalorder %s279, %s280
      %p291 = scmp.eq.s32.totalorder %s25, 0
      %p292 = por %p290, %p291
      %p293 = scmp.ne.s32.totalorder %s279, %s280
      %p294 = scmp.eq.s32.totalorder %s26, 1
      %p295 = por %p293, %p294
      %p297 = scmp.ne.s32.totalorder %s280, %s296
      %p298 = scmp.eq.s32.totalorder %s26, 0
      %p299 = por %p297, %p298
      %p300 = scmp.le.s32.totalorder 1, %s20
      %p301 = scmp.lt.s32.totalorder %s20, 3
      %p302 = pnand %p300, %p301
      %p303 = pneg %p302
      // Predicated region
      $region9: #{tpu_custom_call.1} parent=5 // pred_check
        _
      $region10: #{tpu_custom_call.1} parent=5 // pred_check_branch
        %305 = sbr.rel (%p302) target = $region12
      $region11: #{tpu_custom_call.1} parent=5 // pred_region
        %s306 = ssub.s32 %s20, 1
        // Predicated region
        $region13: #{tpu_custom_call.1} parent=11 // pred_check
          %p307 = pneg %p119
        $region14: #{tpu_custom_call.1} parent=11 // pred_check_branch
          %309 = sbr.rel (%p307) target = $region16
        $region15: #{tpu_custom_call.1} parent=11 // pred_region
          _
        $region16: #{tpu_custom_call.1} parent=11 // pred_fallthru
          _
        // Predicated region
        $region17: #{tpu_custom_call.1} parent=11 // pred_check
          %p310 = pneg %p140
        $region18: #{tpu_custom_call.1} parent=11 // pred_check_branch
          %312 = sbr.rel (%p310) target = $region20
        $region19: #{tpu_custom_call.1} parent=11 // pred_region
          _
        $region20: #{tpu_custom_call.1} parent=11 // pred_fallthru
          _
        // Predicated region
        $region21: #{tpu_custom_call.1} parent=11 // pred_check
          %p313 = pneg %p161
        $region22: #{tpu_custom_call.1} parent=11 // pred_check_branch
          %315 = sbr.rel (%p313) target = $region24
        $region23: #{tpu_custom_call.1} parent=11 // pred_region
          _
        $region24: #{tpu_custom_call.1} parent=11 // pred_fallthru
          _
        // Predicated region
        $region25: #{tpu_custom_call.1} parent=11 // pred_check
          %p316 = pneg %p182
        $region26: #{tpu_custom_call.1} parent=11 // pred_check_branch
          %318 = sbr.rel (%p316) target = $region28
        $region27: #{tpu_custom_call.1} parent=11 // pred_region
          _
        $region28: #{tpu_custom_call.1} parent=11 // pred_fallthru
          _
        // Predicated region
        $region29: #{tpu_custom_call.1} parent=11 // pred_check
          %p319 = pneg %p203
        $region30: #{tpu_custom_call.1} parent=11 // pred_check_branch
          %321 = sbr.rel (%p319) target = $region32
        $region31: #{tpu_custom_call.1} parent=11 // pred_region
          _
        $region32: #{tpu_custom_call.1} parent=11 // pred_fallthru
          _
        // Predicated region
        $region33: #{tpu_custom_call.1} parent=11 // pred_check
          %p322 = pneg %p224
        $region34: #{tpu_custom_call.1} parent=11 // pred_check_branch
          %324 = sbr.rel (%p322) target = $region36
        $region35: #{tpu_custom_call.1} parent=11 // pred_region
          _
        $region36: #{tpu_custom_call.1} parent=11 // pred_fallthru
          _
        // Predicated region
        $region37: #{tpu_custom_call.1} parent=11 // pred_check
          %p325 = pneg %p245
        $region38: #{tpu_custom_call.1} parent=11 // pred_check_branch
          %327 = sbr.rel (%p325) target = $region40
        $region39: #{tpu_custom_call.1} parent=11 // pred_region
          _
        $region40: #{tpu_custom_call.1} parent=11 // pred_fallthru
          _
        // Predicated region
        $region41: #{tpu_custom_call.1} parent=11 // pred_check
          %p328 = pneg %p266
        $region42: #{tpu_custom_call.1} parent=11 // pred_check_branch
          %330 = sbr.rel (%p328) target = $region44
        $region43: #{tpu_custom_call.1} parent=11 // pred_region
          _
        $region44: #{tpu_custom_call.1} parent=11 // pred_fallthru
          _
      $region12: #{tpu_custom_call.1} parent=5 // pred_fallthru
        _
      %p331 = scmp.lt.s32.totalorder %s20, 2
      // Predicated region
      $region45: #{tpu_custom_call.1} parent=5 // pred_check
        %p332 = pneg %p331
      $region46: #{tpu_custom_call.1} parent=5 // pred_check_branch
        %334 = sbr.rel (%p332) target = $region48
      $region47: #{tpu_custom_call.1} parent=5 // pred_region
        // Predicated region
        $region49: #{tpu_custom_call.1} parent=47 // pred_check
          %p335 = pneg %p40
        $region50: #{tpu_custom_call.1} parent=47 // pred_check_branch
          %337 = sbr.rel (%p335) target = $region52
        $region51: #{tpu_custom_call.1} parent=47 // pred_region
          %s338 = smul.u32 8, %s20
          %p339 = scmp.lt.s32.totalorder %s338, 15
          %s340 = scalar_select %p339, %s338, 15
          %s341 = smul.addr %s340, 8
          %s342 = scalar_lea.vmem %s0, %s341
          %s343 = smul.u32 8, %s20
        $region52: #{tpu_custom_call.1} parent=47 // pred_fallthru
          _
        // Predicated region
        $region53: #{tpu_custom_call.1} parent=47 // pred_check
          %p344 = pneg %p66
        $region54: #{tpu_custom_call.1} parent=47 // pred_check_branch
          %346 = sbr.rel (%p344) target = $region56
        $region55: #{tpu_custom_call.1} parent=47 // pred_region
          %s347 = smul.u32 8, %s20
          %p348 = scmp.lt.s32.totalorder %s347, 15
          %s349 = scalar_select %p348, %s347, 15
          %s350 = smul.addr %s349, 8
          %s351 = scalar_lea.vmem %s1, %s350
          %s352 = smul.u32 8, %s20
        $region56: #{tpu_custom_call.1} parent=47 // pred_fallthru
          _
        // Predicated region
        $region57: #{tpu_custom_call.1} parent=47 // pred_check
          %p353 = pneg %p92
        $region58: #{tpu_custom_call.1} parent=47 // pred_check_branch
          %355 = sbr.rel (%p353) target = $region60
        $region59: #{tpu_custom_call.1} parent=47 // pred_region
          %s356 = smul.u32 8, %s20
          %p357 = scmp.lt.s32.totalorder %s356, 15
          %s358 = scalar_select %p357, %s356, 15
          %s359 = smul.addr %s358, 8
          %s360 = scalar_lea.vmem %s2, %s359
          %s361 = smul.u32 8, %s20
        $region60: #{tpu_custom_call.1} parent=47 // pred_fallthru
          _
      $region48: #{tpu_custom_call.1} parent=5 // pred_fallthru
        _
      %p362 = scmp.le.s32.totalorder 1, %s20
      %p363 = scmp.lt.s32.totalorder %s20, 3
      %p364 = pnand %p362, %p363
      %p365 = pneg %p364
      // Predicated region
      $region61: #{tpu_custom_call.1} parent=5 // pred_check
        _
      $region62: #{tpu_custom_call.1} parent=5 // pred_check_branch
        %367 = sbr.rel (%p364) target = $region64
      $region63: #{tpu_custom_call.1} parent=5 // pred_region
        %s368 = ssub.s32 %s20, 1
        %s369 = smul.u32 8, %s25
        %p370 = scmp.lt.s32.totalorder %s369, 15
        %s371 = scalar_select %p370, %s369, 15
        %s372 = smul.addr %s371, 8
        %s373 = scalar_lea.vmem %s0, %s372
        %p374 = pneg %p46
        %p375 = pneg %p43
        %s376 = smul.u32 8, %s25
        %p377 = scmp.lt.s32.totalorder %s376, 15
        %s378 = scalar_select %p377, %s376, 15
        %s379 = smul.addr %s378, 8
        %s380 = scalar_lea.vmem %s1, %s379
        %p381 = pneg %p72
        %p382 = pneg %p69
        %s383 = smul.u32 8, %s25
        %p384 = scmp.lt.s32.totalorder %s383, 15
        %s385 = scalar_select %p384, %s383, 15
        %s386 = smul.addr %s385, 8
        %s387 = scalar_lea.vmem %s2, %s386
        %p388 = pneg %p98
        %p389 = pneg %p95
        %p390 = pneg %p119
        %p391 = pneg %p116
        %p392 = pneg %p140
        %p393 = pneg %p137
        %p394 = pneg %p161
        %p395 = pneg %p158
        %p396 = pneg %p182
        %p397 = pneg %p179
        %p398 = pneg %p203
        %p399 = pneg %p200
        %p400 = pneg %p224
        %p401 = pneg %p221
        %p402 = pneg %p245
        %p403 = pneg %p242
        %p404 = pneg %p266
        %p405 = pneg %p263
        %p406 = pneg %p292
        %p407 = pneg %p289
        %s408 = sand.u32 %s279, 1
        %s409 = scalar_lea.sflag [#allocation3], %s408
        %s410 = sand.u32 %s279, 1
        %s411 = scalar_lea.vmem [#allocation2], %s410
        %s412 = smul.u32 8, %s25
        %p413 = scmp.lt.s32.totalorder %s412, 15
        %s414 = scalar_select %p413, %s412, 15
        %s415 = smul.addr %s414, 8
        %s416 = scalar_lea.vmem %s0, %s415
        %s417 = smul.u32 8, %s25
        %s418 = smul.u32 8, %s25
        %p419 = scmp.lt.s32.totalorder %s418, 15
        %s420 = scalar_select %p419, %s418, 15
        %s421 = smul.addr %s420, 8
        %s422 = scalar_lea.vmem %s1, %s421
        %s423 = smul.u32 8, %s25
        %s424 = smul.u32 8, %s25
        %p425 = scmp.lt.s32.totalorder %s424, 15
        %s426 = scalar_select %p425, %s424, 15
        %s427 = smul.addr %s426, 8
        %s428 = scalar_lea.vmem %s2, %s427
        %s429 = smul.u32 8, %s25
        %v431 = vld [vmem:[%s416] sm:$0xff]
        %v432 = vld [vmem:[%s416 + $0x8] sm:$0xff]
        %v433 = vld [vmem:[%s416 + $0x10] sm:$0xff]
        %v434 = vld [vmem:[%s416 + $0x18] sm:$0xff]
        %v435 = vld [vmem:[%s416 + $0x20] sm:$0xff]
        %v436 = vld [vmem:[%s416 + $0x28] sm:$0xff]
        %v437 = vld [vmem:[%s416 + $0x30] sm:$0xff]
        %v438 = vld [vmem:[%s416 + $0x38] sm:$0xff]
        %v439 = vpack.c.bf16 %v432, %v431
        %v440 = vpack.c.bf16 %v434, %v433
        %v441 = vpack.c.bf16 %v436, %v435
        %v442 = vpack.c.bf16 %v438, %v437
        %v443 = vld [vmem:[%s3] sm:$0x3]
        %v444 = vld [vmem:[%s4] sm:$0x1]
        %v446 = vlaneseq
        %v447 = vshrl.u32 %v446, 7
        %v448 = vsub.s32 0, %v447
        %v449 = vrot.slane %v444, %v448
        %vm451 = vcmask 31744
        %v453 = vsel %vm451, %v439, 0
        %v456 = vsel %vm451, %v440, 0
        %v459 = vsel %vm451, %v441, 0
        %v462 = vsel %vm451, %v442, 0
        %vm464 = vcmask 1041408
        %v466 = vsel %vm464, %v443, 0
        %468 = vmatprep.subr.bf16.mxu0 0
        %469 = vmatpush1.bf16.msra.mxu0 0
        %470 = vmatprep.subr.bf16.mxu0 0
        %471 = vmatpush1.bf16.msra.mxu0 0
        %472 = vmatprep.subr.bf16.mxu0 0
        %473 = vmatpush1.bf16.msra.mxu0 0
        %474 = vmatprep.subr.bf16.mxu0 0
        %475 = vmatpush1.bf16.msra.mxu0 0
        %476 = vmatprep.subr.bf16.mxu0 0
        %477 = vmatpush1.bf16.msra.mxu0 0
        %478 = vmatprep.subr.bf16.mxu0 0
        %479 = vmatpush1.bf16.msra.mxu0 0
        %480 = vmatprep.subr.bf16.mxu0 0
        %481 = vmatpush1.bf16.msra.mxu0 0
        %482 = vmatprep.subr.bf16.mxu0 0
        %483 = vmatpush1.bf16.msra.mxu0 %v466
        %484 = vmatprep.subr.bf16.mxu0 0
        %485 = vmatpush2.bf16.msra.mxu0 0
        %486 = vmatprep.subr.bf16.mxu0 0
        %487 = vmatpush2.bf16.msra.mxu0 0
        %488 = vmatprep.subr.bf16.mxu0 0
        %489 = vmatpush2.bf16.msra.mxu0 0
        %490 = vmatprep.subr.bf16.mxu0 0
        %491 = vmatpush2.bf16.msra.mxu0 0
        %492 = vmatprep.subr.bf16.mxu0 0
        %493 = vmatpush2.bf16.msra.mxu0 0
        %494 = vmatprep.subr.bf16.mxu0 0
        %495 = vmatpush2.bf16.msra.mxu0 0
        %496 = vmatprep.subr.bf16.mxu0 0
        %497 = vmatpush2.bf16.msra.mxu0 0
        %498 = vmatprep.subr.bf16.mxu0 0
        %499 = vmatpush2.bf16.msra.mxu0 0
        %500 = vmatprep.mubr.bf16.mxu0 0
        %501 = vmatmul.mubr.bf16.gmra.mxu0 %v453
        %v502 = vpop.f32.mrf.mxu0
        %v503 = vadd.f32 %v449, %v502
        %v504 = vpop.f32.mrf.mxu0
        %v505 = vpop.f32.mrf.mxu0
        %v506 = vadd.f32 %v449, %v505
        %v507 = vpop.f32.mrf.mxu0
        %508 = vmatprep.mubr.bf16.mxu0 0
        %509 = vmatmul.mubr.bf16.gmra.mxu0 %v456
        %v510 = vpop.f32.mrf.mxu0
        %v511 = vadd.f32 %v449, %v510
        %v512 = vpop.f32.mrf.mxu0
        %v513 = vpop.f32.mrf.mxu0
        %v514 = vadd.f32 %v449, %v513
        %v515 = vpop.f32.mrf.mxu0
        %516 = vmatprep.mubr.bf16.mxu0 0
        %517 = vmatmul.mubr.bf16.gmra.mxu0 %v459
        %v518 = vpop.f32.mrf.mxu0
        %v519 = vadd.f32 %v449, %v518
        %v520 = vpop.f32.mrf.mxu0
        %v521 = vpop.f32.mrf.mxu0
        %v522 = vadd.f32 %v449, %v521
        %v523 = vpop.f32.mrf.mxu0
        %524 = vmatprep.mubr.bf16.mxu0 0
        %525 = vmatmul.mubr.bf16.gmra.mxu0 %v462
        %v526 = vpop.f32.mrf.mxu0
        %v527 = vadd.f32 %v449, %v526
        %v528 = vpop.f32.mrf.mxu0
        %v529 = vpop.f32.mrf.mxu0
        %v530 = vadd.f32 %v449, %v529
        %v531 = vpop.f32.mrf.mxu0
        %532 = vdwg.mxu0
        %v533 = vmax.f32 %v503, 0.0
        %v534 = vmax.f32 %v506, 0.0
        %v535 = vmax.f32 %v511, 0.0
        %v536 = vmax.f32 %v514, 0.0
        %v537 = vmax.f32 %v519, 0.0
        %v538 = vmax.f32 %v522, 0.0
        %v539 = vmax.f32 %v527, 0.0
        %v540 = vmax.f32 %v530, 0.0
        %v541 = vpack.c.bf16 %v534, %v533
        %v542 = vpack.c.bf16 %v536, %v535
        %v543 = vpack.c.bf16 %v538, %v537
        %v544 = vpack.c.bf16 %v540, %v539
        %v545 = vld [vmem:[%s5] sm:$0xf]
        %v546 = vld [vmem:[%s5 + $0x4] sm:$0xf]
        %v547 = vld [vmem:[%s5 + $0x8] sm:$0xf]
        %v548 = vld [vmem:[%s5 + $0xc] sm:$0xf]
        %v549 = vld [vmem:[%s6] sm:$0x1]
        %v551 = vlaneseq
        %v552 = vshrl.u32 %v551, 7
        %v553 = vsub.s32 0, %v552
        %v554 = vrot.slane %v549, %v553
        %v560 = vunpack.c.l.b16 %v545
        %v561 = vunpack.c.l.b16 %v546
        %v562 = vunpack.c.l.b16 %v547
        %v563 = vunpack.c.l.b16 %v548
        %v564 = vpack.c.b16 %v561, %v560
        %v565 = vpack.c.b16 %v563, %v562
        %vm568 = vcmask 261120
        %v570 = vsel %vm568, %v541, 0
        %v573 = vsel %vm568, %v542, 0
        %v576 = vsel %vm568, %v543, 0
        %v579 = vsel %vm568, %v544, 0
        %581 = vmatprep.subr.bf16.mxu0 0
        %582 = vmatpush1.bf16.msra.mxu0 0
        %583 = vmatprep.subr.bf16.mxu0 0
        %584 = vmatpush1.bf16.msra.mxu0 0
        %585 = vmatprep.subr.bf16.mxu0 0
        %586 = vmatpush1.bf16.msra.mxu0 0
        %587 = vmatprep.subr.bf16.mxu0 0
        %588 = vmatpush1.bf16.msra.mxu0 0
        %589 = vmatprep.subr.bf16.mxu0 0
        %590 = vmatpush1.bf16.msra.mxu0 0
        %591 = vmatprep.subr.bf16.mxu0 0
        %592 = vmatpush1.bf16.msra.mxu0 0
        %593 = vmatprep.subr.bf16.mxu0 0
        %594 = vmatpush1.bf16.msra.mxu0 %v565
        %595 = vmatprep.subr.bf16.mxu0 0
        %596 = vmatpush1.bf16.msra.mxu0 %v564
        %597 = vmatprep.subr.bf16.mxu0 0
        %598 = vmatpush2.bf16.msra.mxu0 0
        %599 = vmatprep.subr.bf16.mxu0 0
        %600 = vmatpush2.bf16.msra.mxu0 0
        %601 = vmatprep.subr.bf16.mxu0 0
        %602 = vmatpush2.bf16.msra.mxu0 0
        %603 = vmatprep.subr.bf16.mxu0 0
        %604 = vmatpush2.bf16.msra.mxu0 0
        %605 = vmatprep.subr.bf16.mxu0 0
        %606 = vmatpush2.bf16.msra.mxu0 0
        %607 = vmatprep.subr.bf16.mxu0 0
        %608 = vmatpush2.bf16.msra.mxu0 0
        %609 = vmatprep.subr.bf16.mxu0 0
        %610 = vmatpush2.bf16.msra.mxu0 0
        %611 = vmatprep.subr.bf16.mxu0 0
        %612 = vmatpush2.bf16.msra.mxu0 0
        %613 = vmatprep.mubr.bf16.mxu0 0
        %614 = vmatmul.mubr.bf16.gmra.mxu0 %v570
        %v615 = vpop.f32.mrf.mxu0
        %v616 = vadd.f32 %v554, %v615
        %v617 = vpop.f32.mrf.mxu0
        %v618 = vpop.f32.mrf.mxu0
        %v619 = vadd.f32 %v554, %v618
        %v620 = vpop.f32.mrf.mxu0
        %621 = vmatprep.mubr.bf16.mxu0 0
        %622 = vmatmul.mubr.bf16.gmra.mxu0 %v573
        %v623 = vpop.f32.mrf.mxu0
        %v624 = vadd.f32 %v554, %v623
        %v625 = vpop.f32.mrf.mxu0
        %v626 = vpop.f32.mrf.mxu0
        %v627 = vadd.f32 %v554, %v626
        %v628 = vpop.f32.mrf.mxu0
        %629 = vmatprep.mubr.bf16.mxu0 0
        %630 = vmatmul.mubr.bf16.gmra.mxu0 %v576
        %v631 = vpop.f32.mrf.mxu0
        %v632 = vadd.f32 %v554, %v631
        %v633 = vpop.f32.mrf.mxu0
        %v634 = vpop.f32.mrf.mxu0
        %v635 = vadd.f32 %v554, %v634
        %v636 = vpop.f32.mrf.mxu0
        %637 = vmatprep.mubr.bf16.mxu0 0
        %638 = vmatmul.mubr.bf16.gmra.mxu0 %v579
        %v639 = vpop.f32.mrf.mxu0
        %v640 = vadd.f32 %v554, %v639
        %v641 = vpop.f32.mrf.mxu0
        %v642 = vpop.f32.mrf.mxu0
        %v643 = vadd.f32 %v554, %v642
        %v644 = vpop.f32.mrf.mxu0
        %645 = vdwg.mxu0
        %v646 = vld [vmem:[%s422] sm:$0xff]
        %v647 = vld [vmem:[%s422 + $0x8] sm:$0xff]
        %v648 = vld [vmem:[%s422 + $0x10] sm:$0xff]
        %v649 = vld [vmem:[%s422 + $0x18] sm:$0xff]
        %v650 = vld [vmem:[%s422 + $0x20] sm:$0xff]
        %v651 = vld [vmem:[%s422 + $0x28] sm:$0xff]
        %v652 = vld [vmem:[%s422 + $0x30] sm:$0xff]
        %v653 = vld [vmem:[%s422 + $0x38] sm:$0xff]
        %v654 = vpack.c.bf16 %v647, %v646
        %v655 = vpack.c.bf16 %v649, %v648
        %v656 = vpack.c.bf16 %v651, %v650
        %v657 = vpack.c.bf16 %v653, %v652
        %v658 = vld [vmem:[%s7] sm:$0x3]
        %v659 = vld [vmem:[%s8] sm:$0x1]
        %v661 = vlaneseq
        %v662 = vshrl.u32 %v661, 7
        %v663 = vsub.s32 0, %v662
        %v664 = vrot.slane %v659, %v663
        %v667 = vsel %vm451, %v654, 0
        %v670 = vsel %vm451, %v655, 0
        %v673 = vsel %vm451, %v656, 0
        %v676 = vsel %vm451, %v657, 0
        %v679 = vsel %vm464, %v658, 0
        %681 = vmatprep.subr.bf16.mxu0 0
        %682 = vmatpush1.bf16.msra.mxu0 0
        %683 = vmatprep.subr.bf16.mxu0 0
        %684 = vmatpush1.bf16.msra.mxu0 0
        %685 = vmatprep.subr.bf16.mxu0 0
        %686 = vmatpush1.bf16.msra.mxu0 0
        %687 = vmatprep.subr.bf16.mxu0 0
        %688 = vmatpush1.bf16.msra.mxu0 0
        %689 = vmatprep.subr.bf16.mxu0 0
        %690 = vmatpush1.bf16.msra.mxu0 0
        %691 = vmatprep.subr.bf16.mxu0 0
        %692 = vmatpush1.bf16.msra.mxu0 0
        %693 = vmatprep.subr.bf16.mxu0 0
        %694 = vmatpush1.bf16.msra.mxu0 0
        %695 = vmatprep.subr.bf16.mxu0 0
        %696 = vmatpush1.bf16.msra.mxu0 %v679
        %697 = vmatprep.subr.bf16.mxu0 0
        %698 = vmatpush2.bf16.msra.mxu0 0
        %699 = vmatprep.subr.bf16.mxu0 0
        %700 = vmatpush2.bf16.msra.mxu0 0
        %701 = vmatprep.subr.bf16.mxu0 0
        %702 = vmatpush2.bf16.msra.mxu0 0
        %703 = vmatprep.subr.bf16.mxu0 0
        %704 = vmatpush2.bf16.msra.mxu0 0
        %705 = vmatprep.subr.bf16.mxu0 0
        %706 = vmatpush2.bf16.msra.mxu0 0
        %707 = vmatprep.subr.bf16.mxu0 0
        %708 = vmatpush2.bf16.msra.mxu0 0
        %709 = vmatprep.subr.bf16.mxu0 0
        %710 = vmatpush2.bf16.msra.mxu0 0
        %711 = vmatprep.subr.bf16.mxu0 0
        %712 = vmatpush2.bf16.msra.mxu0 0
        %713 = vmatprep.mubr.bf16.mxu0 0
        %714 = vmatmul.mubr.bf16.gmra.mxu0 %v667
        %v715 = vpop.f32.mrf.mxu0
        %v716 = vadd.f32 %v664, %v715
        %v717 = vpop.f32.mrf.mxu0
        %v718 = vpop.f32.mrf.mxu0
        %v719 = vadd.f32 %v664, %v718
        %v720 = vpop.f32.mrf.mxu0
        %721 = vmatprep.mubr.bf16.mxu0 0
        %722 = vmatmul.mubr.bf16.gmra.mxu0 %v670
        %v723 = vpop.f32.mrf.mxu0
        %v724 = vadd.f32 %v664, %v723
        %v725 = vpop.f32.mrf.mxu0
        %v726 = vpop.f32.mrf.mxu0
        %v727 = vadd.f32 %v664, %v726
        %v728 = vpop.f32.mrf.mxu0
        %729 = vmatprep.mubr.bf16.mxu0 0
        %730 = vmatmul.mubr.bf16.gmra.mxu0 %v673
        %v731 = vpop.f32.mrf.mxu0
        %v732 = vadd.f32 %v664, %v731
        %v733 = vpop.f32.mrf.mxu0
        %v734 = vpop.f32.mrf.mxu0
        %v735 = vadd.f32 %v664, %v734
        %v736 = vpop.f32.mrf.mxu0
        %737 = vmatprep.mubr.bf16.mxu0 0
        %738 = vmatmul.mubr.bf16.gmra.mxu0 %v676
        %v739 = vpop.f32.mrf.mxu0
        %v740 = vadd.f32 %v664, %v739
        %v741 = vpop.f32.mrf.mxu0
        %v742 = vpop.f32.mrf.mxu0
        %v743 = vadd.f32 %v664, %v742
        %v744 = vpop.f32.mrf.mxu0
        %745 = vdwg.mxu0
        %v746 = vmax.f32 %v716, 0.0
        %v747 = vmax.f32 %v719, 0.0
        %v748 = vmax.f32 %v724, 0.0
        %v749 = vmax.f32 %v727, 0.0
        %v750 = vmax.f32 %v732, 0.0
        %v751 = vmax.f32 %v735, 0.0
        %v752 = vmax.f32 %v740, 0.0
        %v753 = vmax.f32 %v743, 0.0
        %v754 = vpack.c.bf16 %v747, %v746
        %v755 = vpack.c.bf16 %v749, %v748
        %v756 = vpack.c.bf16 %v751, %v750
        %v757 = vpack.c.bf16 %v753, %v752
        %v758 = vld [vmem:[%s9] sm:$0xf]
        %v759 = vld [vmem:[%s9 + $0x4] sm:$0xf]
        %v760 = vld [vmem:[%s9 + $0x8] sm:$0xf]
        %v761 = vld [vmem:[%s9 + $0xc] sm:$0xf]
        %v762 = vld [vmem:[%s10] sm:$0x1]
        %v764 = vlaneseq
        %v765 = vshrl.u32 %v764, 7
        %v766 = vsub.s32 0, %v765
        %v767 = vrot.slane %v762, %v766
        %v773 = vunpack.c.l.b16 %v758
        %v774 = vunpack.c.l.b16 %v759
        %v775 = vunpack.c.l.b16 %v760
        %v776 = vunpack.c.l.b16 %v761
        %v777 = vpack.c.b16 %v774, %v773
        %v778 = vpack.c.b16 %v776, %v775
        %v782 = vsel %vm568, %v754, 0
        %v785 = vsel %vm568, %v755, 0
        %v788 = vsel %vm568, %v756, 0
        %v791 = vsel %vm568, %v757, 0
        %793 = vmatprep.subr.bf16.mxu0 0
        %794 = vmatpush1.bf16.msra.mxu0 0
        %795 = vmatprep.subr.bf16.mxu0 0
        %796 = vmatpush1.bf16.msra.mxu0 0
        %797 = vmatprep.subr.bf16.mxu0 0
        %798 = vmatpush1.bf16.msra.mxu0 0
        %799 = vmatprep.subr.bf16.mxu0 0
        %800 = vmatpush1.bf16.msra.mxu0 0
        %801 = vmatprep.subr.bf16.mxu0 0
        %802 = vmatpush1.bf16.msra.mxu0 0
        %803 = vmatprep.subr.bf16.mxu0 0
        %804 = vmatpush1.bf16.msra.mxu0 0
        %805 = vmatprep.subr.bf16.mxu0 0
        %806 = vmatpush1.bf16.msra.mxu0 %v778
        %807 = vmatprep.subr.bf16.mxu0 0
        %808 = vmatpush1.bf16.msra.mxu0 %v777
        %809 = vmatprep.subr.bf16.mxu0 0
        %810 = vmatpush2.bf16.msra.mxu0 0
        %811 = vmatprep.subr.bf16.mxu0 0
        %812 = vmatpush2.bf16.msra.mxu0 0
        %813 = vmatprep.subr.bf16.mxu0 0
        %814 = vmatpush2.bf16.msra.mxu0 0
        %815 = vmatprep.subr.bf16.mxu0 0
        %816 = vmatpush2.bf16.msra.mxu0 0
        %817 = vmatprep.subr.bf16.mxu0 0
        %818 = vmatpush2.bf16.msra.mxu0 0
        %819 = vmatprep.subr.bf16.mxu0 0
        %820 = vmatpush2.bf16.msra.mxu0 0
        %821 = vmatprep.subr.bf16.mxu0 0
        %822 = vmatpush2.bf16.msra.mxu0 0
        %823 = vmatprep.subr.bf16.mxu0 0
        %824 = vmatpush2.bf16.msra.mxu0 0
        %825 = vmatprep.mubr.bf16.mxu0 0
        %826 = vmatmul.mubr.bf16.gmra.mxu0 %v782
        %v827 = vpop.f32.mrf.mxu0
        %v828 = vadd.f32 %v767, %v827
        %v829 = vpop.f32.mrf.mxu0
        %v830 = vpop.f32.mrf.mxu0
        %v831 = vadd.f32 %v767, %v830
        %v832 = vpop.f32.mrf.mxu0
        %833 = vmatprep.mubr.bf16.mxu0 0
        %834 = vmatmul.mubr.bf16.gmra.mxu0 %v785
        %v835 = vpop.f32.mrf.mxu0
        %v836 = vadd.f32 %v767, %v835
        %v837 = vpop.f32.mrf.mxu0
        %v838 = vpop.f32.mrf.mxu0
        %v839 = vadd.f32 %v767, %v838
        %v840 = vpop.f32.mrf.mxu0
        %841 = vmatprep.mubr.bf16.mxu0 0
        %842 = vmatmul.mubr.bf16.gmra.mxu0 %v788
        %v843 = vpop.f32.mrf.mxu0
        %v844 = vadd.f32 %v767, %v843
        %v845 = vpop.f32.mrf.mxu0
        %v846 = vpop.f32.mrf.mxu0
        %v847 = vadd.f32 %v767, %v846
        %v848 = vpop.f32.mrf.mxu0
        %849 = vmatprep.mubr.bf16.mxu0 0
        %850 = vmatmul.mubr.bf16.gmra.mxu0 %v791
        %v851 = vpop.f32.mrf.mxu0
        %v852 = vadd.f32 %v767, %v851
        %v853 = vpop.f32.mrf.mxu0
        %v854 = vpop.f32.mrf.mxu0
        %v855 = vadd.f32 %v767, %v854
        %v856 = vpop.f32.mrf.mxu0
        %857 = vdwg.mxu0
        %v858 = vld [vmem:[%s428] sm:$0xff]
        %v859 = vld [vmem:[%s428 + $0x8] sm:$0xff]
        %v860 = vld [vmem:[%s428 + $0x10] sm:$0xff]
        %v861 = vld [vmem:[%s428 + $0x18] sm:$0xff]
        %v862 = vld [vmem:[%s428 + $0x20] sm:$0xff]
        %v863 = vld [vmem:[%s428 + $0x28] sm:$0xff]
        %v864 = vld [vmem:[%s428 + $0x30] sm:$0xff]
        %v865 = vld [vmem:[%s428 + $0x38] sm:$0xff]
        %vm866 = vcmp.lt.f32.partialorder %v858, 0.5
        %vm867 = vcmp.lt.f32.partialorder %v859, 0.5
        %vm868 = vcmp.lt.f32.partialorder %v860, 0.5
        %vm869 = vcmp.lt.f32.partialorder %v861, 0.5
        %vm870 = vcmp.lt.f32.partialorder %v862, 0.5
        %vm871 = vcmp.lt.f32.partialorder %v863, 0.5
        %vm872 = vcmp.lt.f32.partialorder %v864, 0.5
        %vm873 = vcmp.lt.f32.partialorder %v865, 0.5
        %882 = vrot.lane.b32.xlu0 %v616, 1
        %v883 = vpop.permute.xlu0 %882
        %884 = vrot.lane.b32.xlu0 %v619, 1
        %v885 = vpop.permute.xlu0 %884
        %886 = vrot.lane.b32.xlu0 %v624, 1
        %v887 = vpop.permute.xlu0 %886
        %888 = vrot.lane.b32.xlu0 %v627, 1
        %v889 = vpop.permute.xlu0 %888
        %890 = vrot.lane.b32.xlu0 %v632, 1
        %v891 = vpop.permute.xlu0 %890
        %892 = vrot.lane.b32.xlu0 %v635, 1
        %v893 = vpop.permute.xlu0 %892
        %894 = vrot.lane.b32.xlu0 %v640, 1
        %v895 = vpop.permute.xlu0 %894
        %896 = vrot.lane.b32.xlu0 %v643, 1
        %v897 = vpop.permute.xlu0 %896
        %v906 = vsel %vm866, %v883, %v616
        %v907 = vsel %vm867, %v885, %v619
        %v908 = vsel %vm868, %v887, %v624
        %v909 = vsel %vm869, %v889, %v627
        %v910 = vsel %vm870, %v891, %v632
        %v911 = vsel %vm871, %v893, %v635
        %v912 = vsel %vm872, %v895, %v640
        %v913 = vsel %vm873, %v897, %v643
        %922 = vrot.lane.b32.xlu0 %v828, 127
        %v923 = vpop.permute.xlu0 %922
        %924 = vrot.lane.b32.xlu0 %v831, 127
        %v925 = vpop.permute.xlu0 %924
        %926 = vrot.lane.b32.xlu0 %v836, 127
        %v927 = vpop.permute.xlu0 %926
        %928 = vrot.lane.b32.xlu0 %v839, 127
        %v929 = vpop.permute.xlu0 %928
        %930 = vrot.lane.b32.xlu0 %v844, 127
        %v931 = vpop.permute.xlu0 %930
        %932 = vrot.lane.b32.xlu0 %v847, 127
        %v933 = vpop.permute.xlu0 %932
        %934 = vrot.lane.b32.xlu0 %v852, 127
        %v935 = vpop.permute.xlu0 %934
        %936 = vrot.lane.b32.xlu0 %v855, 127
        %v937 = vpop.permute.xlu0 %936
        %v946 = vmax.f32 %v828, %v923
        %v947 = vmax.f32 %v831, %v925
        %v948 = vmax.f32 %v836, %v927
        %v949 = vmax.f32 %v839, %v929
        %v950 = vmax.f32 %v844, %v931
        %v951 = vmax.f32 %v847, %v933
        %v952 = vmax.f32 %v852, %v935
        %v953 = vmax.f32 %v855, %v937
        %962 = vrot.lane.b32.xlu0 %v946, 2
        %v963 = vpop.permute.xlu0 %962
        %964 = vrot.lane.b32.xlu0 %v947, 2
        %v965 = vpop.permute.xlu0 %964
        %966 = vrot.lane.b32.xlu0 %v948, 2
        %v967 = vpop.permute.xlu0 %966
        %968 = vrot.lane.b32.xlu0 %v949, 2
        %v969 = vpop.permute.xlu0 %968
        %970 = vrot.lane.b32.xlu0 %v950, 2
        %v971 = vpop.permute.xlu0 %970
        %972 = vrot.lane.b32.xlu0 %v951, 2
        %v973 = vpop.permute.xlu0 %972
        %974 = vrot.lane.b32.xlu0 %v952, 2
        %v975 = vpop.permute.xlu0 %974
        %976 = vrot.lane.b32.xlu0 %v953, 2
        %v977 = vpop.permute.xlu0 %976
        %v986 = vmul.f32 %v858, %v963
        %v987 = vmul.f32 %v859, %v965
        %v988 = vmul.f32 %v860, %v967
        %v989 = vmul.f32 %v861, %v969
        %v990 = vmul.f32 %v862, %v971
        %v991 = vmul.f32 %v863, %v973
        %v992 = vmul.f32 %v864, %v975
        %v993 = vmul.f32 %v865, %v977
        %1002 = vrot.lane.b32.xlu0 %v858, 2
        %v1003 = vpop.permute.xlu0 %1002
        %1004 = vrot.lane.b32.xlu0 %v859, 2
        %v1005 = vpop.permute.xlu0 %1004
        %1006 = vrot.lane.b32.xlu0 %v860, 2
        %v1007 = vpop.permute.xlu0 %1006
        %1008 = vrot.lane.b32.xlu0 %v861, 2
        %v1009 = vpop.permute.xlu0 %1008
        %1010 = vrot.lane.b32.xlu0 %v862, 2
        %v1011 = vpop.permute.xlu0 %1010
        %1012 = vrot.lane.b32.xlu0 %v863, 2
        %v1013 = vpop.permute.xlu0 %1012
        %1014 = vrot.lane.b32.xlu0 %v864, 2
        %v1015 = vpop.permute.xlu0 %1014
        %1016 = vrot.lane.b32.xlu0 %v865, 2
        %v1017 = vpop.permute.xlu0 %1016
        %v1026 = vadd.f32 %v986, %v1003
        %v1027 = vadd.f32 %v987, %v1005
        %v1028 = vadd.f32 %v988, %v1007
        %v1029 = vadd.f32 %v989, %v1009
        %v1030 = vadd.f32 %v990, %v1011
        %v1031 = vadd.f32 %v991, %v1013
        %v1032 = vadd.f32 %v992, %v1015
        %v1033 = vadd.f32 %v993, %v1017
        %1042 = vrot.lane.b32.xlu0 %v1026, 127
        %v1043 = vpop.permute.xlu0 %1042
        %1044 = vrot.lane.b32.xlu0 %v1027, 127
        %v1045 = vpop.permute.xlu0 %1044
        %1046 = vrot.lane.b32.xlu0 %v1028, 127
        %v1047 = vpop.permute.xlu0 %1046
        %1048 = vrot.lane.b32.xlu0 %v1029, 127
        %v1049 = vpop.permute.xlu0 %1048
        %1050 = vrot.lane.b32.xlu0 %v1030, 127
        %v1051 = vpop.permute.xlu0 %1050
        %1052 = vrot.lane.b32.xlu0 %v1031, 127
        %v1053 = vpop.permute.xlu0 %1052
        %1054 = vrot.lane.b32.xlu0 %v1032, 127
        %v1055 = vpop.permute.xlu0 %1054
        %1056 = vrot.lane.b32.xlu0 %v1033, 127
        %v1057 = vpop.permute.xlu0 %1056
        %v1066 = vsub.f32 %v906, %v1043
        %v1067 = vsub.f32 %v907, %v1045
        %v1068 = vsub.f32 %v908, %v1047
        %v1069 = vsub.f32 %v909, %v1049
        %v1070 = vsub.f32 %v910, %v1051
        %v1071 = vsub.f32 %v911, %v1053
        %v1072 = vsub.f32 %v912, %v1055
        %v1073 = vsub.f32 %v913, %v1057
        %v1074 = vand.u32 2147483647, %v1066
        %v1075 = vand.u32 2147483647, %v1067
        %v1076 = vand.u32 2147483647, %v1068
        %v1077 = vand.u32 2147483647, %v1069
        %v1078 = vand.u32 2147483647, %v1070
        %v1079 = vand.u32 2147483647, %v1071
        %v1080 = vand.u32 2147483647, %v1072
        %v1081 = vand.u32 2147483647, %v1073
        %vm1082 = vcmp.lt.f32.partialorder %v1074, 1.0
        %vm1083 = vcmp.lt.f32.partialorder %v1075, 1.0
        %vm1084 = vcmp.lt.f32.partialorder %v1076, 1.0
        %vm1085 = vcmp.lt.f32.partialorder %v1077, 1.0
        %vm1086 = vcmp.lt.f32.partialorder %v1078, 1.0
        %vm1087 = vcmp.lt.f32.partialorder %v1079, 1.0
        %vm1088 = vcmp.lt.f32.partialorder %v1080, 1.0
        %vm1089 = vcmp.lt.f32.partialorder %v1081, 1.0
        %v1090 = vmul.f32 %v1066, 0.5
        %v1091 = vmul.f32 %v1067, 0.5
        %v1092 = vmul.f32 %v1068, 0.5
        %v1093 = vmul.f32 %v1069, 0.5
        %v1094 = vmul.f32 %v1070, 0.5
        %v1095 = vmul.f32 %v1071, 0.5
        %v1096 = vmul.f32 %v1072, 0.5
        %v1097 = vmul.f32 %v1073, 0.5
        %v1098 = vmul.f32 %v1090, %v1066
        %v1099 = vmul.f32 %v1091, %v1067
        %v1100 = vmul.f32 %v1092, %v1068
        %v1101 = vmul.f32 %v1093, %v1069
        %v1102 = vmul.f32 %v1094, %v1070
        %v1103 = vmul.f32 %v1095, %v1071
        %v1104 = vmul.f32 %v1096, %v1072
        %v1105 = vmul.f32 %v1097, %v1073
        %v1106 = vsub.f32 %v1074, 0.5
        %v1107 = vsub.f32 %v1075, 0.5
        %v1108 = vsub.f32 %v1076, 0.5
        %v1109 = vsub.f32 %v1077, 0.5
        %v1110 = vsub.f32 %v1078, 0.5
        %v1111 = vsub.f32 %v1079, 0.5
        %v1112 = vsub.f32 %v1080, 0.5
        %v1113 = vsub.f32 %v1081, 0.5
        %v1114 = vsel %vm1082, %v1098, %v1106
        %v1115 = vsel %vm1083, %v1099, %v1107
        %v1116 = vsel %vm1084, %v1100, %v1108
        %v1117 = vsel %vm1085, %v1101, %v1109
        %v1118 = vsel %vm1086, %v1102, %v1110
        %v1119 = vsel %vm1087, %v1103, %v1111
        %v1120 = vsel %vm1088, %v1104, %v1112
        %v1121 = vsel %vm1089, %v1105, %v1113
        %1122 = vrot.lane.b32.xlu0 %v858, 126
        %v1123 = vpop.permute.xlu0 %1122
        %1124 = vrot.lane.b32.xlu0 %v859, 126
        %v1125 = vpop.permute.xlu0 %1124
        %1126 = vrot.lane.b32.xlu0 %v860, 126
        %v1127 = vpop.permute.xlu0 %1126
        %1128 = vrot.lane.b32.xlu0 %v861, 126
        %v1129 = vpop.permute.xlu0 %1128
        %1130 = vrot.lane.b32.xlu0 %v862, 126
        %v1131 = vpop.permute.xlu0 %1130
        %1132 = vrot.lane.b32.xlu0 %v863, 126
        %v1133 = vpop.permute.xlu0 %1132
        %1134 = vrot.lane.b32.xlu0 %v864, 126
        %v1135 = vpop.permute.xlu0 %1134
        %1136 = vrot.lane.b32.xlu0 %v865, 126
        %v1137 = vpop.permute.xlu0 %1136
        %v1146 = vmul.f32 %v1114, %v1123
        %v1147 = vmul.f32 %v1115, %v1125
        %v1148 = vmul.f32 %v1116, %v1127
        %v1149 = vmul.f32 %v1117, %v1129
        %v1150 = vmul.f32 %v1118, %v1131
        %v1151 = vmul.f32 %v1119, %v1133
        %v1152 = vmul.f32 %v1120, %v1135
        %v1153 = vmul.f32 %v1121, %v1137
        %1162 = vrot.lane.b32.xlu0 %v1146, 127
        %v1163 = vpop.permute.xlu0 %1162
        %1164 = vrot.lane.b32.xlu0 %v1147, 127
        %v1165 = vpop.permute.xlu0 %1164
        %1166 = vrot.lane.b32.xlu0 %v1148, 127
        %v1167 = vpop.permute.xlu0 %1166
        %1168 = vrot.lane.b32.xlu0 %v1149, 127
        %v1169 = vpop.permute.xlu0 %1168
        %1170 = vrot.lane.b32.xlu0 %v1150, 127
        %v1171 = vpop.permute.xlu0 %1170
        %1172 = vrot.lane.b32.xlu0 %v1151, 127
        %v1173 = vpop.permute.xlu0 %1172
        %1174 = vrot.lane.b32.xlu0 %v1152, 127
        %v1175 = vpop.permute.xlu0 %1174
        %1176 = vrot.lane.b32.xlu0 %v1153, 127
        %v1177 = vpop.permute.xlu0 %1176
        %vm1186 = vcmask 7168
        %v1187 = vsel %vm1186, %v1163, 0.0
        %v1188 = vsel %vm1186, %v1165, 0.0
        %v1189 = vadd.f32 %v1187, %v1188
        %v1190 = vsel %vm1186, %v1167, 0.0
        %v1191 = vadd.f32 %v1189, %v1190
        %v1192 = vsel %vm1186, %v1169, 0.0
        %v1193 = vadd.f32 %v1191, %v1192
        %v1194 = vsel %vm1186, %v1171, 0.0
        %v1195 = vadd.f32 %v1193, %v1194
        %v1196 = vsel %vm1186, %v1173, 0.0
        %v1197 = vadd.f32 %v1195, %v1196
        %v1198 = vsel %vm1186, %v1175, 0.0
        %v1199 = vadd.f32 %v1197, %v1198
        %v1200 = vsel %vm1186, %v1177, 0.0
        %v1201 = vadd.f32 %v1199, %v1200
        %1202 = vadd.xlane.f32.xlu0 %v1201
        %v1203 = vpop.xlane.xlu0 %1202
        %v1204 = vrot.slane %v1203, 4
        %v1205 = vadd.f32 %v1203, %v1204
        %v1206 = vrot.slane %v1205, 2
        %v1207 = vadd.f32 %v1205, %v1206
        %v1208 = vrot.slane %v1207, 1
        %v1209 = vadd.f32 %v1207, %v1208
        %s1210 = vtos %v1209
        %v1211 = vlaneseq
        %v1212 = vand.u32 %v1211, 127
        %vm1213 = vcmp.eq.s32.totalorder %v1212, 0
        %v1214 = vstv %s1210
        %v1215 = vsel %vm1213, %v1214, 0.0
        %1216 = vst [vmem:[%s411] sm:$0x1] %v1215
        %s1217 = sand.u32 %s279, 1
        %s1218 = scalar_lea.sflag [#allocation3], %s1217
        %s1219 = sand.u32 %s279, 1
        %s1220 = scalar_lea.vmem [#allocation2], %s1219
        // Predicated region
        $region65: #{tpu_custom_call.1} parent=63 // pred_check
          %p1221 = pneg %p289
        $region66: #{tpu_custom_call.1} parent=63 // pred_check_branch
          %1223 = sbr.rel (%p1221) target = $region68
        $region67: #{tpu_custom_call.1} parent=63 // pred_region
          %s1225 = ssub.s32 16, 16
          %1226 = vsyncadd %s1218, %s1225
          %s1227 = smul.addr %s25, 16
          %s1228 = scalar_lea.hbm %s11, %s1227
          %s1230 = sshll.u32 %s1220, 4
          %s1231 = int_to_ptr.vmem [resolvable:$true] %s1230
          %1233 = dma.vmem_to_hbm [thread:$0]  %s1231, 16, %s1228, %s1218
        $region68: #{tpu_custom_call.1} parent=63 // pred_fallthru
          _
      $region64: #{tpu_custom_call.1} parent=5 // pred_fallthru
        _
      %p1234 = scmp.le.s32.totalorder 2, %s20
      // Predicated region
      $region69: #{tpu_custom_call.1} parent=5 // pred_check
        %p1235 = pneg %p1234
      $region70: #{tpu_custom_call.1} parent=5 // pred_check_branch
        %1237 = sbr.rel (%p1235) target = $region72
      $region71: #{tpu_custom_call.1} parent=5 // pred_region
        %s1238 = ssub.s32 %s20, 2
        // Predicated region
        $region73: #{tpu_custom_call.1} parent=71 // pred_check
          %p1239 = pneg %p295
        $region74: #{tpu_custom_call.1} parent=71 // pred_check_branch
          %1241 = sbr.rel (%p1239) target = $region76
        $region75: #{tpu_custom_call.1} parent=71 // pred_region
          %s1242 = sand.u32 %s280, 1
          %s1243 = scalar_lea.sflag [#allocation3], %s1242
          %s1244 = sand.u32 %s280, 1
          %s1245 = scalar_lea.vmem [#allocation2], %s1244
          %1246 = dma.done %s1243, 16
        $region76: #{tpu_custom_call.1} parent=71 // pred_fallthru
          _
      $region72: #{tpu_custom_call.1} parent=5 // pred_fallthru
        _
    $region6: #{tpu_custom_call.1} parent=1 // loop_footer
      %s24 = sadd.s32 1, %s20
    $region7: #{tpu_custom_call.1} parent=1 // loop_footer_branch
      %19 = sbr.rel target = $region3
    $region8: #{tpu_custom_call.1} parent=1 // loop_exit
      _
    %1247 = vsyncpa [#allocation3], 1
    %s1248 = scalar_lea.sflag [#allocation3], 1
    %1249 = vsyncpa %s1248, 1

</llo_original>
